<compile_context>
chip_gen: v7x
topology: tpu7x:2x2x1
jax: 0.10.0
libtpu: 0.0.40
codegen_flags: <defaults>
</compile_context>

<pallas_src>
import functools

import jax
import jax.numpy as jnp
from jax.experimental import pallas as pl
from jax.experimental.pallas import tpu as pltpu


def _round_up(x, m):
    return ((x + m - 1) // m) * m


def pooler_kernel(x_ref, w_ref, b_ref, o_ref):
    # x_ref: (tm, K)   w_ref: (K, tn)  (already transposed -> canonical MXU shape)
    # b_ref: (1, tn)   o_ref: (tm, tn)
    acc = jnp.dot(x_ref[...], w_ref[...], preferred_element_type=jnp.float32)
    acc = acc + b_ref[...].astype(jnp.float32)
    o_ref[...] = jnp.tanh(acc).astype(o_ref.dtype)


def prepare_pooler_params(weight, bias, param_dtype=None):
    """One-time param prep (outside the per-call jit).

    weight: PyTorch nn.Linear layout [out, in]; returned transposed to [in, out]
    so the kernel contracts (1, 0) -- no per-call transpose, no XLU pass.
    param_dtype: optionally cast params once (e.g. jnp.bfloat16) to halve the
    HBM weight-read bytes in the memory-bound regime.
    """
    w_t = jnp.asarray(weight).T            # executed eagerly -> materialized once
    b2 = jnp.asarray(bias).reshape(1, -1)
    if param_dtype is not None:
        w_t = w_t.astype(param_dtype)
        b2 = b2.astype(param_dtype)
    return w_t, b2


def _auto_tn(N, K, tm, wsize, xsize, osize, tn_max=512, budget=24 * 2**20):
    """Column-tile width: full N if the (double-buffered) weight fits the budget,
    otherwise the largest multiple of 128 that does."""
    if N % 128 != 0:
        return N  # lane dim must be a multiple of 128 or the full extent
    def est(t):
        return (2 * K * t * wsize          # weight tile, double-buffered
                + 2 * tm * K * xsize       # x tile, double-buffered
                + 2 * tm * t * osize       # out tile, double-buffered
                + 2 * t * wsize)           # bias
    if est(N) <= budget:
        return N
    t = min(tn_max, N)
    while t > 128 and est(t) > budget:
        t -= 128
    return t


@functools.partial(jax.jit, static_argnames=("index", "tm_max", "tn"))
def pooler_forward(hidden_states, w_t, bias2, *, index=0, tm_max=512, tn=None):
    """hidden_states: [B, S, H]; w_t: [H_in, H_out] (pre-transposed); bias2: [1, H_out].

    Returns tanh(hidden_states[:, index] @ w_t + bias) -> [B, H_out].
    """
    B, S, H = hidden_states.shape
    K, N = w_t.shape

    # Pooled token: touches only B*K elements of HBM (no full-array copy).
    x = hidden_states[:, index, :]                       # [B, K]
    out_dtype = x.dtype

    # Row tile: big enough to amortize per-step overhead, but the last tile
    # wastes fewer than 8 rows.
    if B <= tm_max:
        tm = _round_up(B, 8)
    else:
        tm = _round_up(pl.cdiv(B, pl.cdiv(B, tm_max)), 8)
    grid_m = pl.cdiv(B, tm)

    wsize = jnp.dtype(w_t.dtype).itemsize
    xsize = jnp.dtype(x.dtype).itemsize
    osize = jnp.dtype(out_dtype).itemsize
    if tn is None:
        tn = _auto_tn(N, K, tm, wsize, xsize, osize)
    grid_n = pl.cdiv(N, tn)

    est_vmem = (2 * K * tn * wsize + 2 * tm * K * xsize
                + 2 * tm * tn * osize + 2 * tn * wsize)
    cp_kwargs = dict(dimension_semantics=("parallel", "parallel"))
    if est_vmem > 12 * 2**20:
        # Explicit limit for large H (v5e scoped default is 16 MiB, v6e/v7x 32 MiB).
        cp_kwargs["vmem_limit_bytes"] = int(min(64 * 2**20, est_vmem + 8 * 2**20))

    # Grid: column axis outer, row axis inner -> the weight column-tile's block
    # index is constant across the inner axis (fetched once per N tile).
    return pl.pallas_call(
        pooler_kernel,
        out_shape=jax.ShapeDtypeStruct((B, N), out_dtype),
        grid=(grid_n, grid_m),
        in_specs=[
            pl.BlockSpec((tm, K), lambda j, i: (i, 0)),   # pooled-token row tile
            pl.BlockSpec((K, tn), lambda j, i: (0, j)),   # weight column tile
            pl.BlockSpec((1, tn), lambda j, i: (0, j)),   # bias slice
        ],
        out_specs=pl.BlockSpec((tm, tn), lambda j, i: (i, j)),
        compiler_params=pltpu.CompilerParams(**cp_kwargs),
    )(x, w_t, bias2)


def pooler(hidden_states, weight, bias, *, index=0):
    """Drop-in convenience matching the PyTorch module signature (weight in
    [out, in] layout).  For repeated calls, use prepare_pooler_params once and
    call pooler_forward directly."""
    w_t, b2 = prepare_pooler_params(weight, bias)
    return pooler_forward(hidden_states, w_t, b2, index=index)


if __name__ == "__main__":
    key = jax.random.PRNGKey(0)
    k1, k2, k3, k4 = jax.random.split(key, 4)

    # --- Test 1: small f32 shapes (module defaults), tight tolerance ------------
    B, S, H, INDEX = 2, 8, 32, 0
    hidden_states = jax.random.normal(k1, (B, S, H), dtype=jnp.float32)
    weight = jax.random.normal(k2, (H, H), dtype=jnp.float32) * (1.0 / jnp.sqrt(H))
    bias = jax.random.normal(k3, (H,), dtype=jnp.float32) * 0.1

    w_t, b2 = prepare_pooler_params(weight, bias)
    out = jax.block_until_ready(pooler_forward(hidden_states, w_t, b2, index=INDEX))
    ref = jnp.tanh(hidden_states[:, INDEX, :] @ weight.T + bias)
    assert out.shape == (B, H), out.shape
    assert jnp.allclose(out, ref, atol=1e-5, rtol=1e-5), "f32 mismatch vs reference"

    # --- Test 2: bf16 params + activations, ragged batch, multi-tile grid -------
    # B2=20 with tm_max=8 -> 3 row tiles (last one masked); tn=128 -> 2 column
    # tiles; exercises the edge-masking path and the N-tiled weight path.
    B2, S2, H2, IDX2 = 20, 4, 256, 1
    hs2 = jax.random.normal(k4, (B2, S2, H2), dtype=jnp.float32)
    w2 = jax.random.normal(k2, (H2, H2), dtype=jnp.float32) * (1.0 / jnp.sqrt(H2))
    bv2 = jax.random.normal(k3, (H2,), dtype=jnp.float32) * 0.1

    w2_t, b2_2 = prepare_pooler_params(w2, bv2, param_dtype=jnp.bfloat16)
    out2 = jax.block_until_ready(
        pooler_forward(hs2.astype(jnp.bfloat16), w2_t, b2_2,
                       index=IDX2, tm_max=8, tn=128))
    ref2 = jnp.tanh(hs2[:, IDX2, :] @ w2.T + bv2)
    assert out2.shape == (B2, H2), out2.shape
    assert jnp.allclose(out2.astype(jnp.float32), ref2, atol=5e-2, rtol=5e-2), \
        "bf16 mismatch vs f32 reference"

    print("KERNEL_OK")
</pallas_src>

<mosaic_0001>
module attributes {stable_mosaic.version = 11 : i64} {
  func.func @pooler_kernel(%arg0: i32, %arg1: i32, %arg2: memref<8x32xf32, #tpu.memory_space<vmem>>, %arg3: memref<32x32xf32, #tpu.memory_space<vmem>>, %arg4: memref<1x32xf32, #tpu.memory_space<vmem>>, %arg5: memref<8x32xf32, #tpu.memory_space<vmem>>) attributes {dimension_semantics = [#tpu.dimension_semantics<parallel>, #tpu.dimension_semantics<parallel>], iteration_bounds = array<i64: 1, 1>, scalar_prefetch = 0 : i64, scratch_operands = 0 : i64, tpu.core_type = #tpu.core_type<tc>, window_params = [{transform_indices = @transform_0, window_bounds = array<i64: 8, 32>}, {transform_indices = @transform_1, window_bounds = array<i64: 32, 32>}, {transform_indices = @transform_2, window_bounds = array<i64: 1, 32>}, {transform_indices = @transform_3, window_bounds = array<i64: 8, 32>}]} {
    %c0 = arith.constant 0 : index
    %c0_0 = arith.constant 0 : index
    %0 = vector.load %arg2[%c0, %c0_0] : memref<8x32xf32, #tpu.memory_space<vmem>>, vector<8x32xf32>
    %c0_1 = arith.constant 0 : index
    %c0_2 = arith.constant 0 : index
    %1 = vector.load %arg3[%c0_1, %c0_2] : memref<32x32xf32, #tpu.memory_space<vmem>>, vector<32x32xf32>
    %cst = arith.constant dense<0.000000e+00> : vector<8x32xf32>
    %2 = tpu.matmul %0, %1, %cst {dimension_numbers = #tpu.dot_dimension_numbers<[1], [0], [0], [1], [0, 0, 1, 1], [], []>} : vector<8x32xf32>, vector<32x32xf32>, vector<8x32xf32> -> vector<8x32xf32>
    %c0_3 = arith.constant 0 : index
    %c0_4 = arith.constant 0 : index
    %3 = vector.load %arg4[%c0_3, %c0_4] : memref<1x32xf32, #tpu.memory_space<vmem>>, vector<1x32xf32>
    %4 = vector.broadcast %3 : vector<1x32xf32> to vector<8x32xf32>
    %5 = arith.addf %2, %4 : vector<8x32xf32>
    %6 = math.tanh %5 : vector<8x32xf32>
    %c0_5 = arith.constant 0 : index
    %c0_6 = arith.constant 0 : index
    %7 = vector.load %arg5[%c0_5, %c0_6] : memref<8x32xf32, #tpu.memory_space<vmem>>, vector<8x32xf32>
    tpu.vector_store %arg5[%c0_5, %c0_6], %6 {strides = array<i32>} : memref<8x32xf32, #tpu.memory_space<vmem>>, vector<8x32xf32>,
    return
  }
  func.func @transform_0(%arg0: i32, %arg1: i32) -> (i32, i32) {
    %c0_i32 = arith.constant 0 : i32
    %c0_i32_0 = arith.constant 0 : i32
    return %arg1, %c0_i32 : i32, i32
  }
  func.func @transform_1(%arg0: i32, %arg1: i32) -> (i32, i32) {
    %c0_i32 = arith.constant 0 : i32
    %c0_i32_0 = arith.constant 0 : i32
    return %c0_i32, %arg0 : i32, i32
  }
  func.func @transform_2(%arg0: i32, %arg1: i32) -> (i32, i32) {
    %c0_i32 = arith.constant 0 : i32
    %c0_i32_0 = arith.constant 0 : i32
    return %c0_i32, %arg0 : i32, i32
  }
  func.func @transform_3(%arg0: i32, %arg1: i32) -> (i32, i32) {
    %c0_i32 = arith.constant 0 : i32
    return %arg1, %arg0 : i32, i32
  }
}

</mosaic_0001>

<llo_original>
// kernel: pooler_forward.1
$region0: #{pooler_forward.1}
  #allocation0 [shape = 'u32[]', space=smem, size = 0x4, offset = 0x4, fixed_abs, tag = 'smem constant byte address 0x4 - core index']
  #allocation1 [shape = 'u32[144,128]{1,0:T(1,128)}', space=vmem, size = 0x12000, scoped, tag = 'internal scratch']
  %s0 = inlined_call_operand.vmem [shape: f32[2,32], index: 0, kind: input, shape index: {}]
  %s1 = inlined_call_operand.hbm [shape: f32[32,32], index: 1, kind: input, shape index: {}]
  %s2 = inlined_call_operand.vmem [shape: f32[1,32], index: 2, kind: input, shape index: {}]
  %s3 = inlined_call_operand.hbm [shape: f32[2,32], index: 3, kind: output, shape index: {}]
  %s4 = sld [smem:[#allocation0]]
  $region26: #{pooler_forward.1} parent=0
    _
  %s6 = ssub.s32 1, %s4
  %s7 = scalar_select 0, %s6, %s4
  $region1: #{pooler_forward.1} parent=0
    #allocation2 [shape = 'u8[16384]{0}', space=vmem, size = 0x4000, scoped, tag = 'input window, operand 1, single buffered']
    #allocation3 [shape = 's32[1]{0}', space=sflag, size = 0x4, scoped, tag = 'scoped memory for pooler_forward.1']
    #allocation4 [shape = 's32[1]{0}', space=sflag, size = 0x4, scoped, tag = 'scoped memory for pooler_forward.1']
    #allocation5 [shape = 'u8[4096]{0}', space=vmem, size = 0x1000, scoped, tag = 'output window, operand 0, single buffered']
    %8 = vsyncpa [#allocation3], 0
    %9 = vsyncpa [#allocation4], 0
    // Predicated region
    $region2: #{pooler_forward.1} parent=1 // pred_check
      _
    $region3: #{pooler_forward.1} parent=1 // pred_check_branch
      %11 = sbr.rel (0) target = $region5
    $region4: #{pooler_forward.1} parent=1 // pred_region
      _
    $region5: #{pooler_forward.1} parent=1 // pred_fallthru
      _
    // Predicated region
    $region6: #{pooler_forward.1} parent=1 // pred_check
      _
    $region7: #{pooler_forward.1} parent=1 // pred_check_branch
      %13 = sbr.rel (0) target = $region9
    $region8: #{pooler_forward.1} parent=1 // pred_region
      %s15 = ssub.s32 512, 512
      %16 = vsyncadd [#allocation3], %s15
      %s17 = sshll.u32 [#allocation2], 4
      %s18 = int_to_ptr.vmem [resolvable:$true] %s17
      %23 = dma.hbm_to_vmem [thread:$0]  %s1, 512, %s18, [#allocation3], 128, 128, 8
    $region9: #{pooler_forward.1} parent=1 // pred_fallthru
      _
    // Predicated region
    $region10: #{pooler_forward.1} parent=1 // pred_check
      _
    $region11: #{pooler_forward.1} parent=1 // pred_check_branch
      %25 = sbr.rel (0) target = $region13
    $region12: #{pooler_forward.1} parent=1 // pred_region
      _
    $region13: #{pooler_forward.1} parent=1 // pred_fallthru
      _
    // Predicated region
    $region14: #{pooler_forward.1} parent=1 // pred_check
      _
    $region15: #{pooler_forward.1} parent=1 // pred_check_branch
      %27 = sbr.rel (0) target = $region17
    $region16: #{pooler_forward.1} parent=1 // pred_region
      %28 = dma.done [#allocation3], 512
    $region17: #{pooler_forward.1} parent=1 // pred_fallthru
      _
    %v29 = vld [vmem:[%s0] sm:$0xff]
    %v30 = vld [vmem:[#allocation2] sm:$0xff]
    %v31 = vld [vmem:[#allocation2 + $0x8] sm:$0xff]
    %v32 = vld [vmem:[#allocation2 + $0x10] sm:$0xff]
    %v33 = vld [vmem:[#allocation2 + $0x18] sm:$0xff]
    %v34 = vld [vmem:[%s2] sm:$0x1]
    %v36 = vlaneseq
    %v37 = vshrl.u32 %v36, 7
    %v38 = vsub.s32 0, %v37
    %v39 = vrot.slane %v34, %v38
    %vm41 = vcmask 261120
    %v43 = vsel %vm41, %v29, 0
    %45 = vmatprep.subr.mxu0 0.0
    %46 = vmatpush1.msra.mxu0 %v30
    %47 = vmatprep.subr.mxu0 0.0
    %48 = vmatpush1.msra.mxu0 %v31
    %49 = vmatprep.subr.mxu0 0.0
    %50 = vmatpush1.msra.mxu0 %v32
    %51 = vmatprep.subr.mxu0 0.0
    %52 = vmatpush1.msra.mxu0 %v33
    %53 = vmatprep.subr.mxu0 0.0
    %54 = vmatpush1.msra.mxu0 0.0
    %55 = vmatprep.subr.mxu0 0.0
    %56 = vmatpush1.msra.mxu0 0.0
    %57 = vmatprep.subr.mxu0 0.0
    %58 = vmatpush1.msra.mxu0 0.0
    %59 = vmatprep.subr.mxu0 0.0
    %60 = vmatpush1.msra.mxu0 0.0
    %61 = vmatprep.subr.mxu0 0.0
    %62 = vmatpush1.msra.mxu0 0.0
    %63 = vmatprep.subr.mxu0 0.0
    %64 = vmatpush1.msra.mxu0 0.0
    %65 = vmatprep.subr.mxu0 0.0
    %66 = vmatpush1.msra.mxu0 0.0
    %67 = vmatprep.subr.mxu0 0.0
    %68 = vmatpush1.msra.mxu0 0.0
    %69 = vmatprep.subr.mxu0 0.0
    %70 = vmatpush1.msra.mxu0 0.0
    %71 = vmatprep.subr.mxu0 0.0
    %72 = vmatpush1.msra.mxu0 0.0
    %73 = vmatprep.subr.mxu0 0.0
    %74 = vmatpush1.msra.mxu0 0.0
    %75 = vmatprep.subr.mxu0 0.0
    %76 = vmatpush1.msra.mxu0 0.0
    %77 = vmatprep.subr.mxu0 0.0
    %78 = vmatpush1.msra.mxu0 0.0
    %79 = vmatprep.subr.mxu0 0.0
    %80 = vmatpush1.msra.mxu0 0.0
    %81 = vmatprep.subr.mxu0 0.0
    %82 = vmatpush1.msra.mxu0 0.0
    %83 = vmatprep.subr.mxu0 0.0
    %84 = vmatpush1.msra.mxu0 0.0
    %85 = vmatprep.subr.mxu0 0.0
    %86 = vmatpush1.msra.mxu0 0.0
    %87 = vmatprep.subr.mxu0 0.0
    %88 = vmatpush1.msra.mxu0 0.0
    %89 = vmatprep.subr.mxu0 0.0
    %90 = vmatpush1.msra.mxu0 0.0
    %91 = vmatprep.subr.mxu0 0.0
    %92 = vmatpush1.msra.mxu0 0.0
    %93 = vmatprep.subr.mxu0 0.0
    %94 = vmatpush1.msra.mxu0 0.0
    %95 = vmatprep.subr.mxu0 0.0
    %96 = vmatpush1.msra.mxu0 0.0
    %97 = vmatprep.subr.mxu0 0.0
    %98 = vmatpush1.msra.mxu0 0.0
    %99 = vmatprep.subr.mxu0 0.0
    %100 = vmatpush1.msra.mxu0 0.0
    %101 = vmatprep.subr.mxu0 0.0
    %102 = vmatpush1.msra.mxu0 0.0
    %103 = vmatprep.subr.mxu0 0.0
    %104 = vmatpush1.msra.mxu0 0.0
    %105 = vmatprep.subr.mxu0 0.0
    %106 = vmatpush1.msra.mxu0 0.0
    %107 = vmatprep.subr.mxu0 0.0
    %108 = vmatpush1.msra.mxu0 0.0
    %109 = vmatprep.mubr.f32.mxu0 0.0
    %110 = vmatmul.mubr.f32.gmra.mrb[0].mxu0 %v43
    %v111 = vpop.f32.mrb[0].mxu0
    %v112 = vadd.f32 %v39, %v111
    %v113 = vpop.f32.mrb[0].mxu0
    %114 = vdwg.mxu0
    %v115 = vtanh.pop %v112
    %116 = vst.msk [vmem:[#allocation5] sm:$0xff] %vm41, %v115
    // Predicated region
    $region18: #{pooler_forward.1} parent=1 // pred_check
      _
    $region19: #{pooler_forward.1} parent=1 // pred_check_branch
      %118 = sbr.rel (0) target = $region21
    $region20: #{pooler_forward.1} parent=1 // pred_region
      %s120 = ssub.s32 128, 32
      %121 = vsyncadd [#allocation4], %s120
      %s122 = sshll.u32 [#allocation5], 4
      %s123 = int_to_ptr.vmem [resolvable:$true] %s122
      %128 = dma.vmem_to_hbm [thread:$0]  %s123, 32, %s3, [#allocation4], 32, 32, 2
    $region21: #{pooler_forward.1} parent=1 // pred_fallthru
      _
    // Predicated region
    $region22: #{pooler_forward.1} parent=1 // pred_check
      _
    $region23: #{pooler_forward.1} parent=1 // pred_check_branch
      %130 = sbr.rel (0) target = $region25
    $region24: #{pooler_forward.1} parent=1 // pred_region
      %131 = dma.done [#allocation4], 128
    $region25: #{pooler_forward.1} parent=1 // pred_fallthru
      _
    %132 = vsyncpa [#allocation3], 1
    %133 = vsyncpa [#allocation4], 1

</llo_original>
